<compile_context>
chip_gen: v7x
topology: tpu7x:2x2x1
jax: 0.10.0
libtpu: 0.0.40
codegen_flags: <defaults>
</compile_context>

<pallas_src>
import jax
import jax.numpy as jnp
from jax.experimental import pallas as pl
from jax.experimental.pallas import tpu as pltpu


def _round_up(n, m):
    return ((n + m - 1) // m) * m


def _chip_generation():
    """Best-effort TPU generation sniff ('v5', 'v6', 'v7', or 'other')."""
    try:
        kind = jax.devices()[0].device_kind.lower()
    except Exception:
        return "other"
    for gen in ("v7", "v6", "v5"):
        if gen in kind:
            return gen
    return "other"


# (row-tile target, d_ff-tile target, VMEM budget bytes) per generation.
#   v6e: weight-streaming intensity == tm FLOPs/byte; needs tm ~>=680 -> 1024.
#   v7x: 64 MiB VMEM/TC -> tighter budget, tn=256 still matches 256-wide MXU.
#   v5e: roofline ~240 FLOPs/byte -> tm=256 suffices; 128-wide MXU -> tn=256.
_TILE_TABLE = {
    "v7": (512, 256, 56 * 1024 * 1024),
    "v6": (1024, 512, 100 * 1024 * 1024),
    "v5": (256, 256, 96 * 1024 * 1024),
    "other": (256, 256, 64 * 1024 * 1024),
}


def swiglu_kernel(x_ref, w1_ref, wv_ref, w2_ref, o_ref, acc_ref):
    """One (row tile i, d_ff tile j) step of out = (silu(x@W1) * (x@Wv)) @ W2.

    x_ref  : (tm, dm)  VMEM, resident across the d_ff (j) axis
    w1_ref : (dm, tn)  VMEM, d_ff column tile
    wv_ref : (dm, tn)  VMEM, d_ff column tile
    w2_ref : (tn, dm)  VMEM, d_ff row tile
    o_ref  : (tm, dm)  VMEM, written on the last d_ff step
    acc_ref: (tm, dm)  f32 VMEM scratch accumulator
    """
    j = pl.program_id(1)

    x = x_ref[...]
    g = jnp.dot(x, w1_ref[...], preferred_element_type=jnp.float32)   # MXU
    g = g * jax.nn.sigmoid(g)                                         # SiLU (EUP + VPU)
    v = jnp.dot(x, wv_ref[...], preferred_element_type=jnp.float32)   # MXU
    h = (g * v).astype(x.dtype)                                       # gated hidden
    # TODO(synk): training-mode dropout not implemented (identity in eval mode).
    partial = jnp.dot(h, w2_ref[...], preferred_element_type=jnp.float32)

    @pl.when(j == 0)
    def _():
        acc_ref[...] = partial          # first step: write, no zero-init + add

    @pl.when(j > 0)
    def _():
        acc_ref[...] += partial

    @pl.when(j == pl.num_programs(1) - 1)
    def _():
        o_ref[...] = acc_ref[...].astype(o_ref.dtype)


def prepare_swiglu_weights(w1, wv, w2):
    """Pad the (static) weights once at init so per-call forward does no weight copies.

    w1, wv: (d_model, d_ff) pre-transposed nn.Linear weights; w2: (d_ff, d_model).
    Zero padding is semantically neutral: silu(0)*0 = 0 and padded W2 rows/cols are 0.
    """
    d_model, d_ff = w1.shape
    dm_pad = _round_up(d_model, 128)
    dff_pad = _round_up(d_ff, 128)
    w1p = jnp.pad(w1, ((0, dm_pad - d_model), (0, dff_pad - d_ff)))
    wvp = jnp.pad(wv, ((0, dm_pad - d_model), (0, dff_pad - d_ff)))
    w2p = jnp.pad(w2, ((0, dff_pad - d_ff), (0, dm_pad - d_model)))
    return w1p, wvp, w2p


def swiglu_forward(x, w1, wv, w2, *, tm=None, tn=None, vmem_limit_bytes=None):
    """Fused SwiGLU FFN forward (eval mode).

    x       : (..., d_model)
    w1, wv  : (d_model[, padded], d_ff[, padded])  pre-transposed Linear weights
              (optionally already padded via prepare_swiglu_weights)
    w2      : (d_ff[, padded], d_model[, padded])
    """
    d_model = x.shape[-1]
    dm_pad = _round_up(d_model, 128)
    lead_shape = x.shape[:-1]
    x2d = x.reshape(-1, d_model)
    rows = x2d.shape[0]

    # Weights may already be padded (prepare_swiglu_weights); only pad if needed.
    if w1.shape[0] != dm_pad or (w1.shape[1] % 128) != 0:
        w1, wv, w2 = prepare_swiglu_weights(w1, wv, w2)
    dff_pad = w1.shape[1]
    assert w1.shape == (dm_pad, dff_pad) and wv.shape == (dm_pad, dff_pad)
    assert w2.shape == (dff_pad, dm_pad)

    gen = _chip_generation()
    tm_target, tn_target, budget = _TILE_TABLE[gen]
    if vmem_limit_bytes is None:
        vmem_limit_bytes = budget

    sub = 16 if x.dtype == jnp.bfloat16 else 8          # sublane pack for activations
    act_bytes = jnp.dtype(x.dtype).itemsize
    w_bytes = jnp.dtype(w1.dtype).itemsize
    out_bytes = act_bytes

    # d_ff reduction tile: largest multiple of 128 dividing dff_pad, <= chip target.
    if tn is None:
        tn = 128
        t = (min(tn_target, dff_pad) // 128) * 128
        while t >= 128:
            if dff_pad % t == 0:
                tn = t
                break
            t -= 128

    # Row tile: chip target, clipped by row count and by the VMEM budget
    # (double-buffered x/W1/Wv/W2/out tiles + f32 accumulator + g/v/h temporaries).
    if tm is None:
        fixed = 6 * dm_pad * tn * w_bytes                          # W1+Wv+W2, 2x buffered
        per_tm = dm_pad * (2 * act_bytes + 2 * out_bytes + 4) + 12 * tn
        tm_budget = max(sub, (int(vmem_limit_bytes * 0.9) - fixed) // per_tm)
        tm = min(tm_target, _round_up(rows, sub), tm_budget)
        tm = max(sub, (tm // sub) * sub)
        # v7x has 2 TensorCores: keep >= 2 row tiles on the "parallel" axis.
        if gen == "v7" and rows >= 2 * sub and (rows + tm - 1) // tm < 2:
            tm = max(sub, _round_up((rows + 1) // 2, sub))
    tm = max(sub, _round_up(tm, sub))

    rows_pad = _round_up(rows, tm)
    need_pad = (rows_pad != rows) or (dm_pad != d_model)
    xp = jnp.pad(x2d, ((0, rows_pad - rows), (0, dm_pad - d_model))) if need_pad else x2d

    grid = (rows_pad // tm, dff_pad // tn)

    out_p = pl.pallas_call(
        swiglu_kernel,
        out_shape=jax.ShapeDtypeStruct((rows_pad, dm_pad), x.dtype),
        grid_spec=pltpu.PrefetchScalarGridSpec(
            num_scalar_prefetch=0,
            grid=grid,
            in_specs=[
                pl.BlockSpec((tm, dm_pad), lambda i, j: (i, 0)),   # x rows (resident over j)
                pl.BlockSpec((dm_pad, tn), lambda i, j: (0, j)),   # W1 column tile
                pl.BlockSpec((dm_pad, tn), lambda i, j: (0, j)),   # Wv column tile
                pl.BlockSpec((tn, dm_pad), lambda i, j: (j, 0)),   # W2 row tile
            ],
            out_specs=pl.BlockSpec((tm, dm_pad), lambda i, j: (i, 0)),
            scratch_shapes=[pltpu.VMEM((tm, dm_pad), jnp.float32)],
        ),
        compiler_params=pltpu.CompilerParams(
            dimension_semantics=("parallel", "arbitrary"),
            vmem_limit_bytes=int(vmem_limit_bytes),
        ),
    )(xp, w1, wv, w2)

    out = out_p[:rows, :d_model] if need_pad else out_p
    return out.reshape(*lead_shape, d_model)


def _reference(x, w1, wv, w2):
    """Pure-JAX reference mirroring the kernel's precision handling."""
    g = jnp.einsum("...d,df->...f", x, w1, preferred_element_type=jnp.float32)
    g = g * jax.nn.sigmoid(g)
    v = jnp.einsum("...d,df->...f", x, wv, preferred_element_type=jnp.float32)
    h = (g * v).astype(x.dtype)
    o = jnp.einsum("...f,fm->...m", h, w2, preferred_element_type=jnp.float32)
    return o.astype(x.dtype)


if __name__ == "__main__":
    key = jax.random.PRNGKey(0)

    # --- Test 1: small module-consistent shapes (f32), auto tiles.
    #             d_model=32 -> 128 lanes, d_ff=64 -> one 128-wide tile. --------
    batch, seq, d_model, d_ff = 2, 8, 32, 64
    kx, k1, kv, k2, key = jax.random.split(key, 5)
    x = jax.random.normal(kx, (batch, seq, d_model), dtype=jnp.float32)
    lim1 = 1.0 / jnp.sqrt(jnp.float32(d_model))
    lim2 = 1.0 / jnp.sqrt(jnp.float32(d_ff))
    w1 = jax.random.uniform(k1, (d_model, d_ff), jnp.float32, -lim1, lim1)
    wv = jax.random.uniform(kv, (d_model, d_ff), jnp.float32, -lim1, lim1)
    w2 = jax.random.uniform(k2, (d_ff, d_model), jnp.float32, -lim2, lim2)

    # Pad the static weights once (init-time), reuse across calls.
    w1p, wvp, w2p = prepare_swiglu_weights(w1, wv, w2)
    out = jax.block_until_ready(swiglu_forward(x, w1p, wvp, w2p))
    ref = _reference(x, w1, wv, w2)
    assert out.shape == (batch, seq, d_model)
    assert jnp.allclose(out, ref, atol=1e-4, rtol=1e-4)

    # --- Test 2: bf16 MXU inputs, explicit multi-tile grid (2 row x 2 d_ff
    #             tiles) to exercise the reduction accumulator + pipelining. ---
    batch2, seq2, dm2, dff2 = 2, 128, 128, 512
    kx, k1, kv, k2, key = jax.random.split(key, 5)
    x2 = jax.random.normal(kx, (batch2, seq2, dm2), dtype=jnp.bfloat16)
    l1 = 1.0 / jnp.sqrt(jnp.float32(dm2))
    l2 = 1.0 / jnp.sqrt(jnp.float32(dff2))
    w1b = jax.random.uniform(k1, (dm2, dff2), jnp.float32, -l1, l1).astype(jnp.bfloat16)
    wvb = jax.random.uniform(kv, (dm2, dff2), jnp.float32, -l1, l1).astype(jnp.bfloat16)
    w2b = jax.random.uniform(k2, (dff2, dm2), jnp.float32, -l2, l2).astype(jnp.bfloat16)

    out2 = jax.block_until_ready(swiglu_forward(x2, w1b, wvb, w2b, tm=128, tn=256))
    ref2 = _reference(x2, w1b, wvb, w2b)
    assert out2.shape == (batch2, seq2, dm2)
    assert jnp.allclose(out2.astype(jnp.float32), ref2.astype(jnp.float32),
                        atol=3e-2, rtol=3e-2)

    # --- Test 3: ragged shapes (rows=15, d_model=40, d_ff=96) to exercise the
    #             padding / slicing fallback path with auto tiles. -------------
    kx, k1, kv, k2, key = jax.random.split(key, 5)
    x3 = jax.random.normal(kx, (3, 5, 40), dtype=jnp.float32)
    l1 = 1.0 / jnp.sqrt(jnp.float32(40))
    l2 = 1.0 / jnp.sqrt(jnp.float32(96))
    w13 = jax.random.uniform(k1, (40, 96), jnp.float32, -l1, l1)
    wv3 = jax.random.uniform(kv, (40, 96), jnp.float32, -l1, l1)
    w23 = jax.random.uniform(k2, (96, 40), jnp.float32, -l2, l2)
    out3 = jax.block_until_ready(swiglu_forward(x3, w13, wv3, w23))
    ref3 = _reference(x3, w13, wv3, w23)
    assert out3.shape == (3, 5, 40)
    assert jnp.allclose(out3, ref3, atol=1e-4, rtol=1e-4)

    print("KERNEL_OK")
</pallas_src>

<mosaic_0001>
module attributes {stable_mosaic.version = 11 : i64} {
  func.func @swiglu_kernel(%arg0: i32, %arg1: i32, %arg2: memref<16x128xf32, #tpu.memory_space<vmem>>, %arg3: memref<128x128xf32, #tpu.memory_space<vmem>>, %arg4: memref<128x128xf32, #tpu.memory_space<vmem>>, %arg5: memref<128x128xf32, #tpu.memory_space<vmem>>, %arg6: memref<16x128xf32, #tpu.memory_space<vmem>>, %arg7: memref<16x128xf32, #tpu.memory_space<vmem>>) attributes {dimension_semantics = [#tpu.dimension_semantics<parallel>, #tpu.dimension_semantics<arbitrary>], iteration_bounds = array<i64: 1, 1>, scalar_prefetch = 0 : i64, scratch_operands = 1 : i64, tpu.core_type = #tpu.core_type<tc>, window_params = [{transform_indices = @transform_0, window_bounds = array<i64: 16, 128>}, {transform_indices = @transform_1, window_bounds = array<i64: 128, 128>}, {transform_indices = @transform_2, window_bounds = array<i64: 128, 128>}, {transform_indices = @transform_3, window_bounds = array<i64: 128, 128>}, {transform_indices = @transform_4, window_bounds = array<i64: 16, 128>}]} {
    %c0 = arith.constant 0 : index
    %c0_0 = arith.constant 0 : index
    %0 = vector.load %arg2[%c0, %c0_0] : memref<16x128xf32, #tpu.memory_space<vmem>>, vector<16x128xf32>
    %c0_1 = arith.constant 0 : index
    %c0_2 = arith.constant 0 : index
    %1 = vector.load %arg3[%c0_1, %c0_2] : memref<128x128xf32, #tpu.memory_space<vmem>>, vector<128x128xf32>
    %cst = arith.constant dense<0.000000e+00> : vector<16x128xf32>
    %2 = tpu.matmul %0, %1, %cst {dimension_numbers = #tpu.dot_dimension_numbers<[1], [0], [0], [1], [0, 0, 1, 1], [], []>} : vector<16x128xf32>, vector<128x128xf32>, vector<16x128xf32> -> vector<16x128xf32>
    %3 = arith.negf %2 : vector<16x128xf32>
    %4 = math.exp %3 : vector<16x128xf32>
    %cst_3 = arith.constant 1.000000e+00 : f32
    %5 = vector.broadcast %cst_3 : f32 to vector<16x128xf32>
    %6 = arith.addf %5, %4 : vector<16x128xf32>
    %7 = arith.divf %5, %6 : vector<16x128xf32>
    %8 = arith.mulf %2, %7 : vector<16x128xf32>
    %c0_4 = arith.constant 0 : index
    %c0_5 = arith.constant 0 : index
    %9 = vector.load %arg4[%c0_4, %c0_5] : memref<128x128xf32, #tpu.memory_space<vmem>>, vector<128x128xf32>
    %cst_6 = arith.constant dense<0.000000e+00> : vector<16x128xf32>
    %10 = tpu.matmul %0, %9, %cst_6 {dimension_numbers = #tpu.dot_dimension_numbers<[1], [0], [0], [1], [0, 0, 1, 1], [], []>} : vector<16x128xf32>, vector<128x128xf32>, vector<16x128xf32> -> vector<16x128xf32>
    %11 = arith.mulf %8, %10 : vector<16x128xf32>
    %c0_7 = arith.constant 0 : index
    %c0_8 = arith.constant 0 : index
    %12 = vector.load %arg5[%c0_7, %c0_8] : memref<128x128xf32, #tpu.memory_space<vmem>>, vector<128x128xf32>
    %cst_9 = arith.constant dense<0.000000e+00> : vector<16x128xf32>
    %13 = tpu.matmul %11, %12, %cst_9 {dimension_numbers = #tpu.dot_dimension_numbers<[1], [0], [0], [1], [0, 0, 1, 1], [], []>} : vector<16x128xf32>, vector<128x128xf32>, vector<16x128xf32> -> vector<16x128xf32>
    %c0_i32 = arith.constant 0 : i32
    %14 = arith.cmpi eq, %arg1, %c0_i32 : i32
    %15 = arith.extui %14 : i1 to i32
    %c0_i32_10 = arith.constant 0 : i32
    %16 = arith.cmpi ne, %15, %c0_i32_10 : i32
    scf.if %16 {
      %c0_15 = arith.constant 0 : index
      %c0_16 = arith.constant 0 : index
      %23 = vector.load %arg7[%c0_15, %c0_16] : memref<16x128xf32, #tpu.memory_space<vmem>>, vector<16x128xf32>
      tpu.vector_store %arg7[%c0_15, %c0_16], %13 {strides = array<i32>} : memref<16x128xf32, #tpu.memory_space<vmem>>, vector<16x128xf32>,
    } else {
    }
    %c0_i32_11 = arith.constant 0 : i32
    %17 = arith.cmpi sgt, %arg1, %c0_i32_11 : i32
    %18 = arith.extui %17 : i1 to i32
    %c0_i32_12 = arith.constant 0 : i32
    %19 = arith.cmpi ne, %18, %c0_i32_12 : i32
    scf.if %19 {
      %c0_15 = arith.constant 0 : index
      %c0_16 = arith.constant 0 : index
      %23 = vector.load %arg7[%c0_15, %c0_16] : memref<16x128xf32, #tpu.memory_space<vmem>>, vector<16x128xf32>
      %24 = arith.addf %23, %13 : vector<16x128xf32>
      %c0_17 = arith.constant 0 : index
      %c0_18 = arith.constant 0 : index
      %25 = vector.load %arg7[%c0_17, %c0_18] : memref<16x128xf32, #tpu.memory_space<vmem>>, vector<16x128xf32>
      tpu.vector_store %arg7[%c0_17, %c0_18], %24 {strides = array<i32>} : memref<16x128xf32, #tpu.memory_space<vmem>>, vector<16x128xf32>,
    } else {
    }
    %c0_i32_13 = arith.constant 0 : i32
    %20 = arith.cmpi eq, %arg1, %c0_i32_13 : i32
    %21 = arith.extui %20 : i1 to i32
    %c0_i32_14 = arith.constant 0 : i32
    %22 = arith.cmpi ne, %21, %c0_i32_14 : i32
    scf.if %22 {
      %c0_15 = arith.constant 0 : index
      %c0_16 = arith.constant 0 : index
      %23 = vector.load %arg7[%c0_15, %c0_16] : memref<16x128xf32, #tpu.memory_space<vmem>>, vector<16x128xf32>
      %c0_17 = arith.constant 0 : index
      %c0_18 = arith.constant 0 : index
      %24 = vector.load %arg6[%c0_17, %c0_18] : memref<16x128xf32, #tpu.memory_space<vmem>>, vector<16x128xf32>
      tpu.vector_store %arg6[%c0_17, %c0_18], %23 {strides = array<i32>} : memref<16x128xf32, #tpu.memory_space<vmem>>, vector<16x128xf32>,
    } else {
    }
    return
  }
  func.func @transform_0(%arg0: i32, %arg1: i32) -> (i32, i32) {
    %c0_i32 = arith.constant 0 : i32
    %c0_i32_0 = arith.constant 0 : i32
    return %arg0, %c0_i32 : i32, i32
  }
  func.func @transform_1(%arg0: i32, %arg1: i32) -> (i32, i32) {
    %c0_i32 = arith.constant 0 : i32
    %c0_i32_0 = arith.constant 0 : i32
    return %c0_i32, %arg1 : i32, i32
  }
  func.func @transform_2(%arg0: i32, %arg1: i32) -> (i32, i32) {
    %c0_i32 = arith.constant 0 : i32
    %c0_i32_0 = arith.constant 0 : i32
    return %c0_i32, %arg1 : i32, i32
  }
  func.func @transform_3(%arg0: i32, %arg1: i32) -> (i32, i32) {
    %c0_i32 = arith.constant 0 : i32
    %c0_i32_0 = arith.constant 0 : i32
    return %arg1, %c0_i32 : i32, i32
  }
  func.func @transform_4(%arg0: i32, %arg1: i32) -> (i32, i32) {
    %c0_i32 = arith.constant 0 : i32
    %c0_i32_0 = arith.constant 0 : i32
    return %arg0, %c0_i32 : i32, i32
  }
}

</mosaic_0001>

<llo_original>
// kernel: tpu_custom_call.1
$region0: #{tpu_custom_call.1}
  #allocation0 [shape = 'u32[]', space=smem, size = 0x4, offset = 0x4, fixed_abs, tag = 'smem constant byte address 0x4 - core index']
  #allocation1 [shape = 'u32[144,128]{1,0:T(1,128)}', space=vmem, size = 0x12000, scoped, tag = 'internal scratch']
  #allocation2 [shape = 'f32[16,128]{1,0:T(8,128)}', space=vmem, size = 0x2000, scoped, tag = 'scratch operand']
  %s0 = inlined_call_operand.hbm [shape: f32[16,128], index: 0, kind: input, shape index: {}]
  %s1 = inlined_call_operand.hbm [shape: f32[128,128], index: 1, kind: input, shape index: {}]
  %s2 = inlined_call_operand.hbm [shape: f32[128,128], index: 2, kind: input, shape index: {}]
  %s3 = inlined_call_operand.hbm [shape: f32[128,128], index: 3, kind: input, shape index: {}]
  %s4 = inlined_call_operand.hbm [shape: f32[16,128], index: 4, kind: output, shape index: {}]
  %s5 = sld [smem:[#allocation0]]
  $region54: #{tpu_custom_call.1} parent=0
    _
  %s7 = ssub.s32 1, %s5
  %s8 = scalar_select 0, %s7, %s5
  $region1: #{tpu_custom_call.1} parent=0
    #allocation3 [shape = 'u8[8192]{0}', space=vmem, size = 0x2000, scoped, tag = 'input window, operand 0, single buffered']
    #allocation4 [shape = 's32[1]{0}', space=sflag, size = 0x4, scoped, tag = 'scoped memory for tpu_custom_call.1']
    #allocation5 [shape = 's32[1]{0}', space=sflag, size = 0x4, scoped, tag = 'scoped memory for tpu_custom_call.1']
    #allocation6 [shape = 'u8[65536]{0}', space=vmem, size = 0x10000, scoped, tag = 'input window, operand 1, single buffered']
    #allocation7 [shape = 's32[1]{0}', space=sflag, size = 0x4, scoped, tag = 'scoped memory for tpu_custom_call.1']
    #allocation8 [shape = 'u8[65536]{0}', space=vmem, size = 0x10000, scoped, tag = 'input window, operand 2, single buffered']
    #allocation9 [shape = 'u8[65536]{0}', space=vmem, size = 0x10000, scoped, tag = 'input window, operand 3, single buffered']
    #allocation10 [shape = 's32[1]{0}', space=sflag, size = 0x4, scoped, tag = 'scoped memory for tpu_custom_call.1']
    #allocation11 [shape = 'u8[8192]{0}', space=vmem, size = 0x2000, scoped, tag = 'output window, operand 0, single buffered']
    %9 = vsyncpa [#allocation4], 0
    %10 = vsyncpa [#allocation7], 0
    %11 = vsyncpa [#allocation10], 0
    %12 = vsyncpa [#allocation5], 0
    // Predicated region
    $region2: #{tpu_custom_call.1} parent=1 // pred_check
      _
    $region3: #{tpu_custom_call.1} parent=1 // pred_check_branch
      %14 = sbr.rel (0) target = $region5
    $region4: #{tpu_custom_call.1} parent=1 // pred_region
      %s16 = ssub.s32 256, 256
      %17 = vsyncadd [#allocation4], %s16
      %s18 = sshll.u32 [#allocation3], 4
      %s19 = int_to_ptr.vmem [resolvable:$true] %s18
      %24 = dma.hbm_to_vmem [thread:$0]  %s0, 256, %s19, [#allocation4], 128, 128, 8
    $region5: #{tpu_custom_call.1} parent=1 // pred_fallthru
      _
    // Predicated region
    $region6: #{tpu_custom_call.1} parent=1 // pred_check
      _
    $region7: #{tpu_custom_call.1} parent=1 // pred_check_branch
      %26 = sbr.rel (0) target = $region9
    $region8: #{tpu_custom_call.1} parent=1 // pred_region
      %s28 = ssub.s32 2048, 2048
      %29 = vsyncadd [#allocation7], %s28
      %s30 = sshll.u32 [#allocation6], 4
      %s31 = int_to_ptr.vmem [resolvable:$true] %s30
      %36 = dma.hbm_to_vmem [thread:$0]  %s1, 2048, %s31, [#allocation7], 128, 128, 8
    $region9: #{tpu_custom_call.1} parent=1 // pred_fallthru
      _
    // Predicated region
    $region10: #{tpu_custom_call.1} parent=1 // pred_check
      _
    $region11: #{tpu_custom_call.1} parent=1 // pred_check_branch
      %38 = sbr.rel (0) target = $region13
    $region12: #{tpu_custom_call.1} parent=1 // pred_region
      %s40 = ssub.s32 2048, 2048
      %41 = vsyncadd [#allocation7], %s40
      %s42 = sshll.u32 [#allocation8], 4
      %s43 = int_to_ptr.vmem [resolvable:$true] %s42
      %48 = dma.hbm_to_vmem [thread:$0]  %s2, 2048, %s43, [#allocation7], 128, 128, 8
    $region13: #{tpu_custom_call.1} parent=1 // pred_fallthru
      _
    // Predicated region
    $region14: #{tpu_custom_call.1} parent=1 // pred_check
      _
    $region15: #{tpu_custom_call.1} parent=1 // pred_check_branch
      %50 = sbr.rel (0) target = $region17
    $region16: #{tpu_custom_call.1} parent=1 // pred_region
      %s52 = ssub.s32 2048, 2048
      %53 = vsyncadd [#allocation10], %s52
      %s54 = sshll.u32 [#allocation9], 4
      %s55 = int_to_ptr.vmem [resolvable:$true] %s54
      %60 = dma.hbm_to_vmem [thread:$0]  %s3, 2048, %s55, [#allocation10], 128, 128, 8
    $region17: #{tpu_custom_call.1} parent=1 // pred_fallthru
      _
    // Predicated region
    $region18: #{tpu_custom_call.1} parent=1 // pred_check
      _
    $region19: #{tpu_custom_call.1} parent=1 // pred_check_branch
      %62 = sbr.rel (0) target = $region21
    $region20: #{tpu_custom_call.1} parent=1 // pred_region
      %63 = dma.done [#allocation4], 256
    $region21: #{tpu_custom_call.1} parent=1 // pred_fallthru
      _
    // Predicated region
    $region22: #{tpu_custom_call.1} parent=1 // pred_check
      _
    $region23: #{tpu_custom_call.1} parent=1 // pred_check_branch
      %65 = sbr.rel (0) target = $region25
    $region24: #{tpu_custom_call.1} parent=1 // pred_region
      %66 = dma.done [#allocation7], 2048
    $region25: #{tpu_custom_call.1} parent=1 // pred_fallthru
      _
    // Predicated region
    $region26: #{tpu_custom_call.1} parent=1 // pred_check
      _
    $region27: #{tpu_custom_call.1} parent=1 // pred_check_branch
      %68 = sbr.rel (0) target = $region29
    $region28: #{tpu_custom_call.1} parent=1 // pred_region
      %69 = dma.done [#allocation7], 2048
    $region29: #{tpu_custom_call.1} parent=1 // pred_fallthru
      _
    // Predicated region
    $region30: #{tpu_custom_call.1} parent=1 // pred_check
      _
    $region31: #{tpu_custom_call.1} parent=1 // pred_check_branch
      %71 = sbr.rel (0) target = $region33
    $region32: #{tpu_custom_call.1} parent=1 // pred_region
      %72 = dma.done [#allocation10], 2048
    $region33: #{tpu_custom_call.1} parent=1 // pred_fallthru
      _
    %v73 = vld [vmem:[#allocation3] sm:$0xff]
    %v74 = vld [vmem:[#allocation3 + $0x8] sm:$0xff]
    %v75 = vld [vmem:[#allocation6] sm:$0xff]
    %v76 = vld [vmem:[#allocation6 + $0x8] sm:$0xff]
    %v77 = vld [vmem:[#allocation6 + $0x10] sm:$0xff]
    %v78 = vld [vmem:[#allocation6 + $0x18] sm:$0xff]
    %v79 = vld [vmem:[#allocation6 + $0x20] sm:$0xff]
    %v80 = vld [vmem:[#allocation6 + $0x28] sm:$0xff]
    %v81 = vld [vmem:[#allocation6 + $0x30] sm:$0xff]
    %v82 = vld [vmem:[#allocation6 + $0x38] sm:$0xff]
    %v83 = vld [vmem:[#allocation6 + $0x40] sm:$0xff]
    %v84 = vld [vmem:[#allocation6 + $0x48] sm:$0xff]
    %v85 = vld [vmem:[#allocation6 + $0x50] sm:$0xff]
    %v86 = vld [vmem:[#allocation6 + $0x58] sm:$0xff]
    %v87 = vld [vmem:[#allocation6 + $0x60] sm:$0xff]
    %v88 = vld [vmem:[#allocation6 + $0x68] sm:$0xff]
    %v89 = vld [vmem:[#allocation6 + $0x70] sm:$0xff]
    %v90 = vld [vmem:[#allocation6 + $0x78] sm:$0xff]
    %91 = vmatprep.subr.mxu0 0.0
    %92 = vmatpush1.msra.mxu0 %v75
    %93 = vmatprep.subr.mxu0 0.0
    %94 = vmatpush1.msra.mxu0 %v76
    %95 = vmatprep.subr.mxu0 0.0
    %96 = vmatpush1.msra.mxu0 %v77
    %97 = vmatprep.subr.mxu0 0.0
    %98 = vmatpush1.msra.mxu0 %v78
    %99 = vmatprep.subr.mxu0 0.0
    %100 = vmatpush1.msra.mxu0 %v79
    %101 = vmatprep.subr.mxu0 0.0
    %102 = vmatpush1.msra.mxu0 %v80
    %103 = vmatprep.subr.mxu0 0.0
    %104 = vmatpush1.msra.mxu0 %v81
    %105 = vmatprep.subr.mxu0 0.0
    %106 = vmatpush1.msra.mxu0 %v82
    %107 = vmatprep.subr.mxu0 0.0
    %108 = vmatpush1.msra.mxu0 %v83
    %109 = vmatprep.subr.mxu0 0.0
    %110 = vmatpush1.msra.mxu0 %v84
    %111 = vmatprep.subr.mxu0 0.0
    %112 = vmatpush1.msra.mxu0 %v85
    %113 = vmatprep.subr.mxu0 0.0
    %114 = vmatpush1.msra.mxu0 %v86
    %115 = vmatprep.subr.mxu0 0.0
    %116 = vmatpush1.msra.mxu0 %v87
    %117 = vmatprep.subr.mxu0 0.0
    %118 = vmatpush1.msra.mxu0 %v88
    %119 = vmatprep.subr.mxu0 0.0
    %120 = vmatpush1.msra.mxu0 %v89
    %121 = vmatprep.subr.mxu0 0.0
    %122 = vmatpush1.msra.mxu0 %v90
    %123 = vmatprep.subr.mxu0 0.0
    %124 = vmatpush1.msra.mxu0 0.0
    %125 = vmatprep.subr.mxu0 0.0
    %126 = vmatpush1.msra.mxu0 0.0
    %127 = vmatprep.subr.mxu0 0.0
    %128 = vmatpush1.msra.mxu0 0.0
    %129 = vmatprep.subr.mxu0 0.0
    %130 = vmatpush1.msra.mxu0 0.0
    %131 = vmatprep.subr.mxu0 0.0
    %132 = vmatpush1.msra.mxu0 0.0
    %133 = vmatprep.subr.mxu0 0.0
    %134 = vmatpush1.msra.mxu0 0.0
    %135 = vmatprep.subr.mxu0 0.0
    %136 = vmatpush1.msra.mxu0 0.0
    %137 = vmatprep.subr.mxu0 0.0
    %138 = vmatpush1.msra.mxu0 0.0
    %139 = vmatprep.subr.mxu0 0.0
    %140 = vmatpush1.msra.mxu0 0.0
    %141 = vmatprep.subr.mxu0 0.0
    %142 = vmatpush1.msra.mxu0 0.0
    %143 = vmatprep.subr.mxu0 0.0
    %144 = vmatpush1.msra.mxu0 0.0
    %145 = vmatprep.subr.mxu0 0.0
    %146 = vmatpush1.msra.mxu0 0.0
    %147 = vmatprep.subr.mxu0 0.0
    %148 = vmatpush1.msra.mxu0 0.0
    %149 = vmatprep.subr.mxu0 0.0
    %150 = vmatpush1.msra.mxu0 0.0
    %151 = vmatprep.subr.mxu0 0.0
    %152 = vmatpush1.msra.mxu0 0.0
    %153 = vmatprep.subr.mxu0 0.0
    %154 = vmatpush1.msra.mxu0 0.0
    %155 = vmatprep.mubr.f32.mxu0 0.0
    %156 = vmatmul.mubr.f32.gmra.mrb[0].mxu0 %v73
    %v157 = vpop.f32.mrb[0].mxu0
    %v158 = vadd.f32 0.0, %v157
    %v159 = vpop.f32.mrb[0].mxu0
    %160 = vmatprep.mubr.f32.mxu0 0.0
    %161 = vmatmul.mubr.f32.gmra.mrb[0].mxu0 %v74
    %v162 = vpop.f32.mrb[0].mxu0
    %v163 = vadd.f32 0.0, %v162
    %v164 = vpop.f32.mrb[0].mxu0
    %165 = vdwg.mxu0
    %v166 = vxor.u32 %v158, 2147483648
    %v167 = vxor.u32 %v163, 2147483648
    %v168 = vmul.f32 %v166, 1.442695
    %v169 = vpow.pop %v168
    %v170 = vmul.f32 %v167, 1.442695
    %v171 = vpow.pop %v170
    %v172 = vadd.f32 %v169, 1.0
    %v173 = vadd.f32 %v171, 1.0
    %v174 = vrcp.pop %v172
    %v175 = vmul.f32 1.0, %v174
    %v176 = vrcp.pop %v173
    %v177 = vmul.f32 1.0, %v176
    %v178 = vmul.f32 %v158, %v175
    %v179 = vmul.f32 %v163, %v177
    %v180 = vld [vmem:[#allocation8] sm:$0xff]
    %v181 = vld [vmem:[#allocation8 + $0x8] sm:$0xff]
    %v182 = vld [vmem:[#allocation8 + $0x10] sm:$0xff]
    %v183 = vld [vmem:[#allocation8 + $0x18] sm:$0xff]
    %v184 = vld [vmem:[#allocation8 + $0x20] sm:$0xff]
    %v185 = vld [vmem:[#allocation8 + $0x28] sm:$0xff]
    %v186 = vld [vmem:[#allocation8 + $0x30] sm:$0xff]
    %v187 = vld [vmem:[#allocation8 + $0x38] sm:$0xff]
    %v188 = vld [vmem:[#allocation8 + $0x40] sm:$0xff]
    %v189 = vld [vmem:[#allocation8 + $0x48] sm:$0xff]
    %v190 = vld [vmem:[#allocation8 + $0x50] sm:$0xff]
    %v191 = vld [vmem:[#allocation8 + $0x58] sm:$0xff]
    %v192 = vld [vmem:[#allocation8 + $0x60] sm:$0xff]
    %v193 = vld [vmem:[#allocation8 + $0x68] sm:$0xff]
    %v194 = vld [vmem:[#allocation8 + $0x70] sm:$0xff]
    %v195 = vld [vmem:[#allocation8 + $0x78] sm:$0xff]
    %196 = vmatprep.subr.mxu0 0.0
    %197 = vmatpush1.msra.mxu0 %v180
    %198 = vmatprep.subr.mxu0 0.0
    %199 = vmatpush1.msra.mxu0 %v181
    %200 = vmatprep.subr.mxu0 0.0
    %201 = vmatpush1.msra.mxu0 %v182
    %202 = vmatprep.subr.mxu0 0.0
    %203 = vmatpush1.msra.mxu0 %v183
    %204 = vmatprep.subr.mxu0 0.0
    %205 = vmatpush1.msra.mxu0 %v184
    %206 = vmatprep.subr.mxu0 0.0
    %207 = vmatpush1.msra.mxu0 %v185
    %208 = vmatprep.subr.mxu0 0.0
    %209 = vmatpush1.msra.mxu0 %v186
    %210 = vmatprep.subr.mxu0 0.0
    %211 = vmatpush1.msra.mxu0 %v187
    %212 = vmatprep.subr.mxu0 0.0
    %213 = vmatpush1.msra.mxu0 %v188
    %214 = vmatprep.subr.mxu0 0.0
    %215 = vmatpush1.msra.mxu0 %v189
    %216 = vmatprep.subr.mxu0 0.0
    %217 = vmatpush1.msra.mxu0 %v190
    %218 = vmatprep.subr.mxu0 0.0
    %219 = vmatpush1.msra.mxu0 %v191
    %220 = vmatprep.subr.mxu0 0.0
    %221 = vmatpush1.msra.mxu0 %v192
    %222 = vmatprep.subr.mxu0 0.0
    %223 = vmatpush1.msra.mxu0 %v193
    %224 = vmatprep.subr.mxu0 0.0
    %225 = vmatpush1.msra.mxu0 %v194
    %226 = vmatprep.subr.mxu0 0.0
    %227 = vmatpush1.msra.mxu0 %v195
    %228 = vmatprep.subr.mxu0 0.0
    %229 = vmatpush1.msra.mxu0 0.0
    %230 = vmatprep.subr.mxu0 0.0
    %231 = vmatpush1.msra.mxu0 0.0
    %232 = vmatprep.subr.mxu0 0.0
    %233 = vmatpush1.msra.mxu0 0.0
    %234 = vmatprep.subr.mxu0 0.0
    %235 = vmatpush1.msra.mxu0 0.0
    %236 = vmatprep.subr.mxu0 0.0
    %237 = vmatpush1.msra.mxu0 0.0
    %238 = vmatprep.subr.mxu0 0.0
    %239 = vmatpush1.msra.mxu0 0.0
    %240 = vmatprep.subr.mxu0 0.0
    %241 = vmatpush1.msra.mxu0 0.0
    %242 = vmatprep.subr.mxu0 0.0
    %243 = vmatpush1.msra.mxu0 0.0
    %244 = vmatprep.subr.mxu0 0.0
    %245 = vmatpush1.msra.mxu0 0.0
    %246 = vmatprep.subr.mxu0 0.0
    %247 = vmatpush1.msra.mxu0 0.0
    %248 = vmatprep.subr.mxu0 0.0
    %249 = vmatpush1.msra.mxu0 0.0
    %250 = vmatprep.subr.mxu0 0.0
    %251 = vmatpush1.msra.mxu0 0.0
    %252 = vmatprep.subr.mxu0 0.0
    %253 = vmatpush1.msra.mxu0 0.0
    %254 = vmatprep.subr.mxu0 0.0
    %255 = vmatpush1.msra.mxu0 0.0
    %256 = vmatprep.subr.mxu0 0.0
    %257 = vmatpush1.msra.mxu0 0.0
    %258 = vmatprep.subr.mxu0 0.0
    %259 = vmatpush1.msra.mxu0 0.0
    %260 = vmatprep.mubr.f32.mxu0 0.0
    %261 = vmatmul.mubr.f32.gmra.mrb[0].mxu0 %v73
    %v262 = vpop.f32.mrb[0].mxu0
    %v263 = vadd.f32 0.0, %v262
    %v264 = vpop.f32.mrb[0].mxu0
    %265 = vmatprep.mubr.f32.mxu0 0.0
    %266 = vmatmul.mubr.f32.gmra.mrb[0].mxu0 %v74
    %v267 = vpop.f32.mrb[0].mxu0
    %v268 = vadd.f32 0.0, %v267
    %v269 = vpop.f32.mrb[0].mxu0
    %270 = vdwg.mxu0
    %v271 = vmul.f32 %v178, %v263
    %v272 = vmul.f32 %v179, %v268
    %v273 = vld [vmem:[#allocation9] sm:$0xff]
    %v274 = vld [vmem:[#allocation9 + $0x8] sm:$0xff]
    %v275 = vld [vmem:[#allocation9 + $0x10] sm:$0xff]
    %v276 = vld [vmem:[#allocation9 + $0x18] sm:$0xff]
    %v277 = vld [vmem:[#allocation9 + $0x20] sm:$0xff]
    %v278 = vld [vmem:[#allocation9 + $0x28] sm:$0xff]
    %v279 = vld [vmem:[#allocation9 + $0x30] sm:$0xff]
    %v280 = vld [vmem:[#allocation9 + $0x38] sm:$0xff]
    %v281 = vld [vmem:[#allocation9 + $0x40] sm:$0xff]
    %v282 = vld [vmem:[#allocation9 + $0x48] sm:$0xff]
    %v283 = vld [vmem:[#allocation9 + $0x50] sm:$0xff]
    %v284 = vld [vmem:[#allocation9 + $0x58] sm:$0xff]
    %v285 = vld [vmem:[#allocation9 + $0x60] sm:$0xff]
    %v286 = vld [vmem:[#allocation9 + $0x68] sm:$0xff]
    %v287 = vld [vmem:[#allocation9 + $0x70] sm:$0xff]
    %v288 = vld [vmem:[#allocation9 + $0x78] sm:$0xff]
    %289 = vmatprep.subr.mxu0 0.0
    %290 = vmatpush1.msra.mxu0 %v273
    %291 = vmatprep.subr.mxu0 0.0
    %292 = vmatpush1.msra.mxu0 %v274
    %293 = vmatprep.subr.mxu0 0.0
    %294 = vmatpush1.msra.mxu0 %v275
    %295 = vmatprep.subr.mxu0 0.0
    %296 = vmatpush1.msra.mxu0 %v276
    %297 = vmatprep.subr.mxu0 0.0
    %298 = vmatpush1.msra.mxu0 %v277
    %299 = vmatprep.subr.mxu0 0.0
    %300 = vmatpush1.msra.mxu0 %v278
    %301 = vmatprep.subr.mxu0 0.0
    %302 = vmatpush1.msra.mxu0 %v279
    %303 = vmatprep.subr.mxu0 0.0
    %304 = vmatpush1.msra.mxu0 %v280
    %305 = vmatprep.subr.mxu0 0.0
    %306 = vmatpush1.msra.mxu0 %v281
    %307 = vmatprep.subr.mxu0 0.0
    %308 = vmatpush1.msra.mxu0 %v282
    %309 = vmatprep.subr.mxu0 0.0
    %310 = vmatpush1.msra.mxu0 %v283
    %311 = vmatprep.subr.mxu0 0.0
    %312 = vmatpush1.msra.mxu0 %v284
    %313 = vmatprep.subr.mxu0 0.0
    %314 = vmatpush1.msra.mxu0 %v285
    %315 = vmatprep.subr.mxu0 0.0
    %316 = vmatpush1.msra.mxu0 %v286
    %317 = vmatprep.subr.mxu0 0.0
    %318 = vmatpush1.msra.mxu0 %v287
    %319 = vmatprep.subr.mxu0 0.0
    %320 = vmatpush1.msra.mxu0 %v288
    %321 = vmatprep.subr.mxu0 0.0
    %322 = vmatpush1.msra.mxu0 0.0
    %323 = vmatprep.subr.mxu0 0.0
    %324 = vmatpush1.msra.mxu0 0.0
    %325 = vmatprep.subr.mxu0 0.0
    %326 = vmatpush1.msra.mxu0 0.0
    %327 = vmatprep.subr.mxu0 0.0
    %328 = vmatpush1.msra.mxu0 0.0
    %329 = vmatprep.subr.mxu0 0.0
    %330 = vmatpush1.msra.mxu0 0.0
    %331 = vmatprep.subr.mxu0 0.0
    %332 = vmatpush1.msra.mxu0 0.0
    %333 = vmatprep.subr.mxu0 0.0
    %334 = vmatpush1.msra.mxu0 0.0
    %335 = vmatprep.subr.mxu0 0.0
    %336 = vmatpush1.msra.mxu0 0.0
    %337 = vmatprep.subr.mxu0 0.0
    %338 = vmatpush1.msra.mxu0 0.0
    %339 = vmatprep.subr.mxu0 0.0
    %340 = vmatpush1.msra.mxu0 0.0
    %341 = vmatprep.subr.mxu0 0.0
    %342 = vmatpush1.msra.mxu0 0.0
    %343 = vmatprep.subr.mxu0 0.0
    %344 = vmatpush1.msra.mxu0 0.0
    %345 = vmatprep.subr.mxu0 0.0
    %346 = vmatpush1.msra.mxu0 0.0
    %347 = vmatprep.subr.mxu0 0.0
    %348 = vmatpush1.msra.mxu0 0.0
    %349 = vmatprep.subr.mxu0 0.0
    %350 = vmatpush1.msra.mxu0 0.0
    %351 = vmatprep.subr.mxu0 0.0
    %352 = vmatpush1.msra.mxu0 0.0
    %353 = vmatprep.mubr.f32.mxu0 0.0
    %354 = vmatmul.mubr.f32.gmra.mrb[0].mxu0 %v271
    %v355 = vpop.f32.mrb[0].mxu0
    %v356 = vadd.f32 0.0, %v355
    %v357 = vpop.f32.mrb[0].mxu0
    %358 = vmatprep.mubr.f32.mxu0 0.0
    %359 = vmatmul.mubr.f32.gmra.mrb[0].mxu0 %v272
    %v360 = vpop.f32.mrb[0].mxu0
    %v361 = vadd.f32 0.0, %v360
    %v362 = vpop.f32.mrb[0].mxu0
    %363 = vdwg.mxu0
    %p364 = scmp.eq.s32.totalorder 0, 0
    // Predicated region
    $region34: #{tpu_custom_call.1} parent=1 // pred_check
      %p365 = pneg %p364
    $region35: #{tpu_custom_call.1} parent=1 // pred_check_branch
      %367 = sbr.rel (%p365) target = $region37
    $region36: #{tpu_custom_call.1} parent=1 // pred_region
      %368 = vst [vmem:[#allocation2] sm:$0xff] %v356
      %369 = vst [vmem:[#allocation2 + $0x8] sm:$0xff] %v361
    $region37: #{tpu_custom_call.1} parent=1 // pred_fallthru
      _
    %p370 = scmp.gt.s32.totalorder 0, 0
    // Predicated region
    $region38: #{tpu_custom_call.1} parent=1 // pred_check
      %p371 = pneg %p370
    $region39: #{tpu_custom_call.1} parent=1 // pred_check_branch
      %373 = sbr.rel (%p371) target = $region41
    $region40: #{tpu_custom_call.1} parent=1 // pred_region
      %v374 = vld [vmem:[#allocation2] sm:$0xff]
      %v375 = vld [vmem:[#allocation2 + $0x8] sm:$0xff]
      %v376 = vadd.f32 %v374, %v356
      %v377 = vadd.f32 %v375, %v361
      %378 = vst [vmem:[#allocation2] sm:$0xff] %v376
      %379 = vst [vmem:[#allocation2 + $0x8] sm:$0xff] %v377
    $region41: #{tpu_custom_call.1} parent=1 // pred_fallthru
      _
    // Predicated region
    $region42: #{tpu_custom_call.1} parent=1 // pred_check
      %p380 = pneg %p364
    $region43: #{tpu_custom_call.1} parent=1 // pred_check_branch
      %382 = sbr.rel (%p380) target = $region45
    $region44: #{tpu_custom_call.1} parent=1 // pred_region
      %v383 = vld [vmem:[#allocation2] sm:$0xff]
      %v384 = vld [vmem:[#allocation2 + $0x8] sm:$0xff]
      %385 = vst [vmem:[#allocation11] sm:$0xff] %v383
      %386 = vst [vmem:[#allocation11 + $0x8] sm:$0xff] %v384
    $region45: #{tpu_custom_call.1} parent=1 // pred_fallthru
      _
    // Predicated region
    $region46: #{tpu_custom_call.1} parent=1 // pred_check
      _
    $region47: #{tpu_custom_call.1} parent=1 // pred_check_branch
      %388 = sbr.rel (0) target = $region49
    $region48: #{tpu_custom_call.1} parent=1 // pred_region
      %s390 = ssub.s32 256, 256
      %391 = vsyncadd [#allocation5], %s390
      %s392 = sshll.u32 [#allocation11], 4
      %s393 = int_to_ptr.vmem [resolvable:$true] %s392
      %398 = dma.vmem_to_hbm [thread:$0]  %s393, 256, %s4, [#allocation5], 128, 128, 8
    $region49: #{tpu_custom_call.1} parent=1 // pred_fallthru
      _
    // Predicated region
    $region50: #{tpu_custom_call.1} parent=1 // pred_check
      _
    $region51: #{tpu_custom_call.1} parent=1 // pred_check_branch
      %400 = sbr.rel (0) target = $region53
    $region52: #{tpu_custom_call.1} parent=1 // pred_region
      %401 = dma.done [#allocation5], 256
    $region53: #{tpu_custom_call.1} parent=1 // pred_fallthru
      _
    %402 = vsyncpa [#allocation4], 1
    %403 = vsyncpa [#allocation7], 1
    %404 = vsyncpa [#allocation10], 1
    %405 = vsyncpa [#allocation5], 1

</llo_original>
